<compile_context>
chip_gen: v5e
topology: v5e:2x2
jax: 0.10.0
libtpu: 0.0.40
codegen_flags: <defaults>
</compile_context>

<pallas_src>
import functools

import jax
import jax.numpy as jnp
from jax.experimental import pallas as pl
from jax.experimental.pallas import tpu as pltpu


def _round_up(x, m):
    return (x + m - 1) // m * m


def bpr_score_kernel(uid_ref, pid_ref, nid_ref,      # scalar prefetch (SMEM int32)
                     user_tab, item_tab,             # embedding tables (HBM / ANY)
                     out_ref,                        # (TB, 2) f32 VMEM
                     ubuf, pbuf, nbuf, sem):         # scratch
    """One batch tile: gather TB user/pos/neg rows from HBM, then score them."""
    tb = ubuf.shape[0]
    base = pl.program_id(0) * tb

    # ---- fused gather: one row DMA per (stream, row) -----------------------
    @pl.loop(0, tb)
    def _issue(r):
        u = uid_ref[base + r]
        p = pid_ref[base + r]
        n = nid_ref[base + r]
        pltpu.make_async_copy(user_tab.at[pl.ds(u, 1)],
                              ubuf.at[pl.ds(r, 1)], sem.at[0]).start()
        pltpu.make_async_copy(item_tab.at[pl.ds(p, 1)],
                              pbuf.at[pl.ds(r, 1)], sem.at[1]).start()
        pltpu.make_async_copy(item_tab.at[pl.ds(n, 1)],
                              nbuf.at[pl.ds(r, 1)], sem.at[2]).start()

    # Wait with symmetric (same-size) descriptors, one per issued row copy.
    @pl.loop(0, tb)
    def _wait(r):
        pltpu.make_async_copy(user_tab.at[pl.ds(0, 1)],
                              ubuf.at[pl.ds(r, 1)], sem.at[0]).wait()
        pltpu.make_async_copy(item_tab.at[pl.ds(0, 1)],
                              pbuf.at[pl.ds(r, 1)], sem.at[1]).wait()
        pltpu.make_async_copy(item_tab.at[pl.ds(0, 1)],
                              nbuf.at[pl.ds(r, 1)], sem.at[2]).wait()

    # ---- scores: VPU multiply + XLU lane reduction, f32 accumulation -------
    u = ubuf[...].astype(jnp.float32)
    p = pbuf[...].astype(jnp.float32)
    n = nbuf[...].astype(jnp.float32)
    pos = jnp.sum(u * p, axis=1, keepdims=True)   # (TB, 1)
    neg = jnp.sum(u * n, axis=1, keepdims=True)   # (TB, 1)
    out_ref[...] = jnp.concatenate([pos, neg], axis=1)   # single (TB, 2) store


@functools.partial(jax.jit, static_argnames=("tile_b",))
def bpr_forward(user_emb, item_emb, user_ids, item_ids, neg_item_ids, *,
                tile_b=512):
    """BPR.forward: returns (pos_item_score, neg_item_score), each shape (B,)."""
    B = user_ids.shape[0]
    D = user_emb.shape[1]

    # Lane-align the embedding dimension (zero padding keeps scores exact).
    Dp = _round_up(D, 128)
    if Dp != D:
        # In real training the tables should be stored pre-padded; this copy is
        # only a fallback for non-lane-aligned embedding_size.
        user_emb = jnp.pad(user_emb, ((0, 0), (0, Dp - D)))
        item_emb = jnp.pad(item_emb, ((0, 0), (0, Dp - D)))

    # Batch tiling: TB multiple of 8 (f32 sublane), pad B so TB divides it.
    TB = _round_up(min(tile_b, _round_up(B, 8)), 8)
    B_pad = _round_up(B, TB)

    def pad_ids(ids):
        ids = ids.astype(jnp.int32)
        if B_pad != B:
            ids = jnp.pad(ids, (0, B_pad - B))   # pad with row 0 (always valid)
        return ids

    uid = pad_ids(user_ids)
    pid = pad_ids(item_ids)
    nid = pad_ids(neg_item_ids)

    scores = pl.pallas_call(
        bpr_score_kernel,
        out_shape=jax.ShapeDtypeStruct((B_pad, 2), jnp.float32),
        grid_spec=pltpu.PrefetchScalarGridSpec(
            num_scalar_prefetch=3,                 # uid / pid / nid -> SMEM
            grid=(B_pad // TB,),
            in_specs=[
                pl.BlockSpec(memory_space=pl.ANY),   # user table stays in HBM
                pl.BlockSpec(memory_space=pl.ANY),   # item table stays in HBM
            ],
            out_specs=pl.BlockSpec((TB, 2), lambda i, *_: (i, 0)),
            scratch_shapes=[
                pltpu.VMEM((TB, Dp), user_emb.dtype),   # gathered user rows
                pltpu.VMEM((TB, Dp), item_emb.dtype),   # gathered pos-item rows
                pltpu.VMEM((TB, Dp), item_emb.dtype),   # gathered neg-item rows
                pltpu.SemaphoreType.DMA((3,)),
            ],
        ),
        compiler_params=pltpu.CompilerParams(
            dimension_semantics=("parallel",),      # independent batch tiles
            vmem_limit_bytes=32 * 1024 * 1024,      # safe on v5e/v6e/v7x
        ),
    )(uid, pid, nid, user_emb, item_emb)

    return scores[:B, 0], scores[:B, 1]


def xavier_normal(key, shape):
    """Deterministic Xavier-normal init (matches xavier_normal_initialization)."""
    fan_in, fan_out = shape[1], shape[0]
    std = (2.0 / (fan_in + fan_out)) ** 0.5
    return std * jax.random.normal(key, shape, dtype=jnp.float32)


if __name__ == "__main__":
    # Small synthetic config consistent with the module's __init__.
    n_train_users = 16
    n_items = 32
    embedding_size = 128   # lane-aligned per perf feedback (multiple of 128)
    batch = 8

    key = jax.random.PRNGKey(0)
    k_user, k_item, k_u, k_i, k_n = jax.random.split(key, 5)

    # Parameters (nn.Embedding weights), deterministically initialized.
    user_embedding = xavier_normal(k_user, (n_train_users, embedding_size))
    item_embedding = xavier_normal(k_item, (n_items, embedding_size))

    # batch = {'userId': ..., 'itemId': ..., 'neg_itemId': ...}
    user_ids = jax.random.randint(k_u, (batch,), 0, n_train_users, dtype=jnp.int32)
    item_ids = jax.random.randint(k_i, (batch,), 0, n_items, dtype=jnp.int32)
    neg_item_ids = jax.random.randint(k_n, (batch,), 0, n_items, dtype=jnp.int32)

    pos_score, neg_score = bpr_forward(
        user_embedding, item_embedding, user_ids, item_ids, neg_item_ids)
    jax.block_until_ready((pos_score, neg_score))

    # Reference check against plain-JAX semantics of the PyTorch forward.
    u_e = user_embedding[user_ids]
    p_e = item_embedding[item_ids]
    n_e = item_embedding[neg_item_ids]
    ref_pos = jnp.sum(u_e * p_e, axis=1)
    ref_neg = jnp.sum(u_e * n_e, axis=1)
    assert pos_score.shape == (batch,) and neg_score.shape == (batch,)
    assert jnp.allclose(pos_score, ref_pos, atol=1e-5, rtol=1e-5)
    assert jnp.allclose(neg_score, ref_neg, atol=1e-5, rtol=1e-5)

    print("KERNEL_OK")
</pallas_src>

<mosaic_0001>
module attributes {stable_mosaic.version = 11 : i64} {
  func.func @bpr_score_kernel(%arg0: i32, %arg1: memref<8xi32, #tpu.memory_space<smem>>, %arg2: memref<8xi32, #tpu.memory_space<smem>>, %arg3: memref<8xi32, #tpu.memory_space<smem>>, %arg4: memref<16x128xf32, #tpu.memory_space<any>>, %arg5: memref<32x128xf32, #tpu.memory_space<any>>, %arg6: memref<8x2xf32, #tpu.memory_space<vmem>>, %arg7: memref<8x128xf32, #tpu.memory_space<vmem>>, %arg8: memref<8x128xf32, #tpu.memory_space<vmem>>, %arg9: memref<8x128xf32, #tpu.memory_space<vmem>>, %arg10: memref<3x!tpu.dma_semaphore, #tpu.memory_space<semaphore_mem>>) attributes {dimension_semantics = [#tpu.dimension_semantics<parallel>], iteration_bounds = array<i64: 1>, scalar_prefetch = 3 : i64, scratch_operands = 4 : i64, tpu.core_type = #tpu.core_type<tc>, window_params = [{}, {}, {transform_indices = @transform_2, window_bounds = array<i64: 8, 2>}]} {
    %c8_i32 = arith.constant 8 : i32
    %0 = arith.muli %arg0, %c8_i32 : i32
    %c0_i32 = arith.constant 0 : i32
    %c8_i32_0 = arith.constant 8 : i32
    %1 = arith.addi %c0_i32, %c8_i32_0 : i32
    %c1_i32 = arith.constant 1 : i32
    scf.for %arg11 = %c0_i32 to %1 step %c1_i32  : i32 {
      %c1_i32_14 = arith.constant 1 : i32
      %14 = arith.muli %arg11, %c1_i32_14 : i32
      %c0_i32_15 = arith.constant 0 : i32
      %15 = arith.addi %c0_i32_15, %14 : i32
      %16 = arith.addi %0, %15 : i32
      %17 = arith.index_cast %16 : i32 to index
      %18 = memref.load %arg1[%17] : memref<8xi32, #tpu.memory_space<smem>>
      %19 = arith.addi %0, %15 : i32
      %20 = arith.index_cast %19 : i32 to index
      %21 = memref.load %arg2[%20] : memref<8xi32, #tpu.memory_space<smem>>
      %22 = arith.addi %0, %15 : i32
      %23 = arith.index_cast %22 : i32 to index
      %24 = memref.load %arg3[%23] : memref<8xi32, #tpu.memory_space<smem>>
      %c0_i32_16 = arith.constant 0 : i32
      %c0_i32_17 = arith.constant 0 : i32
      %25 = tpu.memref_slice %arg4[%18, %c0_i32_17] : memref<16x128xf32, #tpu.memory_space<any>> -> memref<1x128xf32, #tpu.memory_space<any>>
      %c0_i32_18 = arith.constant 0 : i32
      %26 = tpu.memref_slice %arg7[%15, %c0_i32_18] : memref<8x128xf32, #tpu.memory_space<vmem>> -> memref<1x128xf32, #tpu.memory_space<vmem>>
      %27 = tpu.memref_slice %arg10[%c0_i32_16] : memref<3x!tpu.dma_semaphore, #tpu.memory_space<semaphore_mem>> -> memref<1x!tpu.dma_semaphore, #tpu.memory_space<semaphore_mem>>
      %28 = tpu.memref_squeeze %27 : memref<1x!tpu.dma_semaphore, #tpu.memory_space<semaphore_mem>> -> memref<!tpu.dma_semaphore, #tpu.memory_space<semaphore_mem>>
      tpu.enqueue_dma source(%25 : memref<1x128xf32, #tpu.memory_space<any>>) target(%26 : memref<1x128xf32, #tpu.memory_space<vmem>>) target_semaphore(%28 : memref<!tpu.dma_semaphore, #tpu.memory_space<semaphore_mem>>)
      %c1_i32_19 = arith.constant 1 : i32
      %c0_i32_20 = arith.constant 0 : i32
      %29 = tpu.memref_slice %arg5[%21, %c0_i32_20] : memref<32x128xf32, #tpu.memory_space<any>> -> memref<1x128xf32, #tpu.memory_space<any>>
      %c0_i32_21 = arith.constant 0 : i32
      %30 = tpu.memref_slice %arg8[%15, %c0_i32_21] : memref<8x128xf32, #tpu.memory_space<vmem>> -> memref<1x128xf32, #tpu.memory_space<vmem>>
      %31 = tpu.memref_slice %arg10[%c1_i32_19] : memref<3x!tpu.dma_semaphore, #tpu.memory_space<semaphore_mem>> -> memref<1x!tpu.dma_semaphore, #tpu.memory_space<semaphore_mem>>
      %32 = tpu.memref_squeeze %31 : memref<1x!tpu.dma_semaphore, #tpu.memory_space<semaphore_mem>> -> memref<!tpu.dma_semaphore, #tpu.memory_space<semaphore_mem>>
      tpu.enqueue_dma source(%29 : memref<1x128xf32, #tpu.memory_space<any>>) target(%30 : memref<1x128xf32, #tpu.memory_space<vmem>>) target_semaphore(%32 : memref<!tpu.dma_semaphore, #tpu.memory_space<semaphore_mem>>)
      %c2_i32 = arith.constant 2 : i32
      %c0_i32_22 = arith.constant 0 : i32
      %33 = tpu.memref_slice %arg5[%24, %c0_i32_22] : memref<32x128xf32, #tpu.memory_space<any>> -> memref<1x128xf32, #tpu.memory_space<any>>
      %c0_i32_23 = arith.constant 0 : i32
      %34 = tpu.memref_slice %arg9[%15, %c0_i32_23] : memref<8x128xf32, #tpu.memory_space<vmem>> -> memref<1x128xf32, #tpu.memory_space<vmem>>
      %35 = tpu.memref_slice %arg10[%c2_i32] : memref<3x!tpu.dma_semaphore, #tpu.memory_space<semaphore_mem>> -> memref<1x!tpu.dma_semaphore, #tpu.memory_space<semaphore_mem>>
      %36 = tpu.memref_squeeze %35 : memref<1x!tpu.dma_semaphore, #tpu.memory_space<semaphore_mem>> -> memref<!tpu.dma_semaphore, #tpu.memory_space<semaphore_mem>>
      tpu.enqueue_dma source(%33 : memref<1x128xf32, #tpu.memory_space<any>>) target(%34 : memref<1x128xf32, #tpu.memory_space<vmem>>) target_semaphore(%36 : memref<!tpu.dma_semaphore, #tpu.memory_space<semaphore_mem>>)
    }
    %c8_i32_1 = arith.constant 8 : i32
    %c0_i32_2 = arith.constant 0 : i32
    %c8_i32_3 = arith.constant 8 : i32
    %2 = arith.addi %c0_i32_2, %c8_i32_3 : i32
    %c1_i32_4 = arith.constant 1 : i32
    scf.for %arg11 = %c0_i32_2 to %2 step %c1_i32_4  : i32 {
      %c1_i32_14 = arith.constant 1 : i32
      %14 = arith.muli %arg11, %c1_i32_14 : i32
      %c0_i32_15 = arith.constant 0 : i32
      %15 = arith.addi %c0_i32_15, %14 : i32
      %c0_i32_16 = arith.constant 0 : i32
      %c0_i32_17 = arith.constant 0 : i32
      %c0_i32_18 = arith.constant 0 : i32
      %16 = tpu.memref_slice %arg4[%c0_i32_17, %c0_i32_18] : memref<16x128xf32, #tpu.memory_space<any>> -> memref<1x128xf32, #tpu.memory_space<any>>
      %c0_i32_19 = arith.constant 0 : i32
      %17 = tpu.memref_slice %arg7[%15, %c0_i32_19] : memref<8x128xf32, #tpu.memory_space<vmem>> -> memref<1x128xf32, #tpu.memory_space<vmem>>
      %18 = tpu.memref_slice %arg10[%c0_i32_16] : memref<3x!tpu.dma_semaphore, #tpu.memory_space<semaphore_mem>> -> memref<1x!tpu.dma_semaphore, #tpu.memory_space<semaphore_mem>>
      %19 = tpu.memref_squeeze %18 : memref<1x!tpu.dma_semaphore, #tpu.memory_space<semaphore_mem>> -> memref<!tpu.dma_semaphore, #tpu.memory_space<semaphore_mem>>
      tpu.wait_dma2 semaphore(%19 : memref<!tpu.dma_semaphore, #tpu.memory_space<semaphore_mem>>) src(%16 : memref<1x128xf32, #tpu.memory_space<any>>) dst(%17 : memref<1x128xf32, #tpu.memory_space<vmem>>)
      %c1_i32_20 = arith.constant 1 : i32
      %c0_i32_21 = arith.constant 0 : i32
      %c0_i32_22 = arith.constant 0 : i32
      %20 = tpu.memref_slice %arg5[%c0_i32_21, %c0_i32_22] : memref<32x128xf32, #tpu.memory_space<any>> -> memref<1x128xf32, #tpu.memory_space<any>>
      %c0_i32_23 = arith.constant 0 : i32
      %21 = tpu.memref_slice %arg8[%15, %c0_i32_23] : memref<8x128xf32, #tpu.memory_space<vmem>> -> memref<1x128xf32, #tpu.memory_space<vmem>>
      %22 = tpu.memref_slice %arg10[%c1_i32_20] : memref<3x!tpu.dma_semaphore, #tpu.memory_space<semaphore_mem>> -> memref<1x!tpu.dma_semaphore, #tpu.memory_space<semaphore_mem>>
      %23 = tpu.memref_squeeze %22 : memref<1x!tpu.dma_semaphore, #tpu.memory_space<semaphore_mem>> -> memref<!tpu.dma_semaphore, #tpu.memory_space<semaphore_mem>>
      tpu.wait_dma2 semaphore(%23 : memref<!tpu.dma_semaphore, #tpu.memory_space<semaphore_mem>>) src(%20 : memref<1x128xf32, #tpu.memory_space<any>>) dst(%21 : memref<1x128xf32, #tpu.memory_space<vmem>>)
      %c2_i32 = arith.constant 2 : i32
      %c0_i32_24 = arith.constant 0 : i32
      %c0_i32_25 = arith.constant 0 : i32
      %24 = tpu.memref_slice %arg5[%c0_i32_24, %c0_i32_25] : memref<32x128xf32, #tpu.memory_space<any>> -> memref<1x128xf32, #tpu.memory_space<any>>
      %c0_i32_26 = arith.constant 0 : i32
      %25 = tpu.memref_slice %arg9[%15, %c0_i32_26] : memref<8x128xf32, #tpu.memory_space<vmem>> -> memref<1x128xf32, #tpu.memory_space<vmem>>
      %26 = tpu.memref_slice %arg10[%c2_i32] : memref<3x!tpu.dma_semaphore, #tpu.memory_space<semaphore_mem>> -> memref<1x!tpu.dma_semaphore, #tpu.memory_space<semaphore_mem>>
      %27 = tpu.memref_squeeze %26 : memref<1x!tpu.dma_semaphore, #tpu.memory_space<semaphore_mem>> -> memref<!tpu.dma_semaphore, #tpu.memory_space<semaphore_mem>>
      tpu.wait_dma2 semaphore(%27 : memref<!tpu.dma_semaphore, #tpu.memory_space<semaphore_mem>>) src(%24 : memref<1x128xf32, #tpu.memory_space<any>>) dst(%25 : memref<1x128xf32, #tpu.memory_space<vmem>>)
    }
    %c8_i32_5 = arith.constant 8 : i32
    %c0 = arith.constant 0 : index
    %c0_6 = arith.constant 0 : index
    %3 = vector.load %arg7[%c0, %c0_6] : memref<8x128xf32, #tpu.memory_space<vmem>>, vector<8x128xf32>
    %c0_7 = arith.constant 0 : index
    %c0_8 = arith.constant 0 : index
    %4 = vector.load %arg8[%c0_7, %c0_8] : memref<8x128xf32, #tpu.memory_space<vmem>>, vector<8x128xf32>
    %c0_9 = arith.constant 0 : index
    %c0_10 = arith.constant 0 : index
    %5 = vector.load %arg9[%c0_9, %c0_10] : memref<8x128xf32, #tpu.memory_space<vmem>>, vector<8x128xf32>
    %6 = arith.mulf %3, %4 : vector<8x128xf32>
    %cst = arith.constant dense<0.000000e+00> : vector<8xf32>
    %7 = vector.multi_reduction <add>, %6, %cst [1] : vector<8x128xf32> to vector<8xf32>
    %8 = vector.shape_cast %7 : vector<8xf32> to vector<8x1xf32>
    %9 = arith.mulf %3, %5 : vector<8x128xf32>
    %cst_11 = arith.constant dense<0.000000e+00> : vector<8xf32>
    %10 = vector.multi_reduction <add>, %9, %cst_11 [1] : vector<8x128xf32> to vector<8xf32>
    %11 = vector.shape_cast %10 : vector<8xf32> to vector<8x1xf32>
    %12 = tpu.concatenate %8, %11 in 1 : vector<8x1xf32>, vector<8x1xf32> -> vector<8x2xf32>
    %c0_12 = arith.constant 0 : index
    %c0_13 = arith.constant 0 : index
    %13 = vector.load %arg6[%c0_12, %c0_13] : memref<8x2xf32, #tpu.memory_space<vmem>>, vector<8x2xf32>
    tpu.vector_store %arg6[%c0_12, %c0_13], %12 {strides = array<i32>} : memref<8x2xf32, #tpu.memory_space<vmem>>, vector<8x2xf32>,
    return
  }
  func.func @transform_2(%arg0: i32, %arg1: memref<8xi32, #tpu.memory_space<smem>>, %arg2: memref<8xi32, #tpu.memory_space<smem>>, %arg3: memref<8xi32, #tpu.memory_space<smem>>) -> (i32, i32) {
    %c0_i32 = arith.constant 0 : i32
    %c0_i32_0 = arith.constant 0 : i32
    return %arg0, %c0_i32 : i32, i32
  }
}

</mosaic_0001>

<llo_original>
// kernel: bpr_forward.1
$region0: #{bpr_forward.1}
  #allocation0 [shape = 'u32[]', space=smem, size = 0x4, offset = 0x4, fixed_abs, tag = 'smem constant byte address 0x4 - core index']
  #allocation1 [shape = 'u32[72,128]{1,0:T(1,128)}', space=vmem, size = 0x9000, scoped, tag = 'internal scratch']
  #allocation2 [shape = 'f32[8,128]{1,0:T(8,128)}', space=vmem, size = 0x1000, scoped, tag = 'scratch operand']
  #allocation3 [shape = 'f32[8,128]{1,0:T(8,128)}', space=vmem, size = 0x1000, scoped, tag = 'scratch operand']
  #allocation4 [shape = 'f32[8,128]{1,0:T(8,128)}', space=vmem, size = 0x1000, scoped, tag = 'scratch operand']
  #allocation5 [shape = 's32[3]{0}', space=sflag, size = 0xc, scoped, tag = 'scratch operand']
  #allocation6 [shape = 's32[1]{0}', space=sflag, size = 0x4, scoped, tag = 'scoped memory for bpr_forward.1']
  #allocation7 [shape = 'u8[512]{0}', space=smem, size = 0x200, scoped, tag = 'prefetched SMEM operand 0']
  #allocation8 [shape = 'u8[512]{0}', space=smem, size = 0x200, scoped, tag = 'prefetched SMEM operand 1']
  #allocation9 [shape = 'u8[512]{0}', space=smem, size = 0x200, scoped, tag = 'prefetched SMEM operand 2']
  #allocation10 [shape = 's32[]', space=sflag, size = 0x4, offset = 0, fixed_abs, tag = 'sflag constant byte address 0x0 - dummy sync flag']
  #allocation11 [shape = 's32[]', space=sflag, size = 0x4, offset = 0, fixed_abs, tag = 'sflag constant byte address 0x0 - dummy sync flag']
  #allocation12 [shape = 'u32[]', space=smem, size = 0x4, offset = 0x44, fixed_abs, tag = 'smem constant byte address 0x44 - assertion arg 0']
  #allocation13 [shape = 'u32[]', space=smem, size = 0x4, offset = 0x48, fixed_abs, tag = 'smem constant byte address 0x48 - assertion arg 1']
  #allocation14 [shape = 's32[]', space=sflag, size = 0x4, offset = 0, fixed_abs, tag = 'sflag constant byte address 0x0 - dummy sync flag']
  #allocation15 [shape = 's32[]', space=sflag, size = 0x4, offset = 0, fixed_abs, tag = 'sflag constant byte address 0x0 - dummy sync flag']
  #allocation16 [shape = 's32[]', space=sflag, size = 0x4, offset = 0, fixed_abs, tag = 'sflag constant byte address 0x0 - dummy sync flag']
  #allocation17 [shape = 's32[]', space=sflag, size = 0x4, offset = 0, fixed_abs, tag = 'sflag constant byte address 0x0 - dummy sync flag']
  %s0 = inlined_call_operand.vmem [shape: s32[8], index: 0, kind: input, shape index: {}]
  %s1 = inlined_call_operand.vmem [shape: s32[8], index: 1, kind: input, shape index: {}]
  %s2 = inlined_call_operand.vmem [shape: s32[8], index: 2, kind: input, shape index: {}]
  %s3 = inlined_call_operand.hbm [shape: f32[16,128], index: 3, kind: input, shape index: {}]
  %s4 = inlined_call_operand.hbm [shape: f32[32,128], index: 4, kind: input, shape index: {}]
  %s5 = inlined_call_operand.vmem [shape: f32[8,2], index: 5, kind: output, shape index: {}]
  %s6 = sld [smem:[#allocation0]]
  $region36: #{bpr_forward.1} parent=0
    _
  %s8 = ssub.s32 1, %s6
  %s9 = scalar_select 0, %s8, %s6
  %s11 = sshll.u32 %s0, 4
  %s12 = int_to_ptr.vmem [resolvable:$true] %s11
  %14 = dma.vmem_to_smem %s12, 16, [#allocation7], [#allocation6]
  %s16 = sshll.u32 %s1, 4
  %s17 = int_to_ptr.vmem [resolvable:$true] %s16
  %19 = dma.vmem_to_smem %s17, 16, [#allocation8], [#allocation6]
  %s21 = sshll.u32 %s2, 4
  %s22 = int_to_ptr.vmem [resolvable:$true] %s21
  %24 = dma.vmem_to_smem %s22, 16, [#allocation9], [#allocation6]
  %26 = dma.done [#allocation6], 48
  %27 = sfence
  %s28 = smul.u32 0, 8
  loop: start=0, step=1, limit=8
  $region2: #{bpr_forward.1} parent=0 // loop_pre_header
    _
  $region3: #{bpr_forward.1} parent=0 // loop_header
    %s30 = sphi 0, %s34
    %p31 = scmp.ge.s32.totalorder %s30, 8
  $region4: #{bpr_forward.1} parent=0 // loop_header_branch
    %33 = sbr.rel (%p31) target = $region8
  $region5: #{bpr_forward.1} parent=0 // loop_body
    %s35 = sadd.s32 %s28, %s30
    %s36 = sld [smem:[#allocation7 + %s35]]
    %s37 = sld [smem:[#allocation8 + %s35]]
    %s38 = sld [smem:[#allocation9 + %s35]]
    %s39 = scalar_lea.hbm %s3, %s36
    %s40 = scalar_lea.vmem [#allocation2], %s30
    // Predicated region
    $region9: #{bpr_forward.1} parent=5 // pred_check
      _
    $region10: #{bpr_forward.1} parent=5 // pred_check_branch
      %42 = sbr.rel target = $region12
    $region11: #{bpr_forward.1} parent=5 // pred_region
      %43 = sst [smem:[#allocation12]] [#allocation11]
      %44 = sst [smem:[#allocation13]] [#allocation10]
    $region12: #{bpr_forward.1} parent=5 // pred_fallthru
      _
    %46 = shalt.err (0)
    %s48 = sshll.u32 %s39, 4
    %s49 = int_to_ptr.hbm [resolvable:$true] %s48
    %s50 = sshll.u32 %s40, 4
    %s51 = int_to_ptr.vmem [resolvable:$true] %s50
    %53 = dma.hbm_to_vmem [thread:$0]  %s49, 16, %s51, [#allocation5]
    %s54 = scalar_lea.hbm %s4, %s37
    %s55 = scalar_lea.vmem [#allocation3], %s30
    %s56 = scalar_lea.sflag [#allocation5], 1
    // Predicated region
    $region13: #{bpr_forward.1} parent=5 // pred_check
      _
    $region14: #{bpr_forward.1} parent=5 // pred_check_branch
      %58 = sbr.rel target = $region16
    $region15: #{bpr_forward.1} parent=5 // pred_region
      %59 = sst [smem:[#allocation12]] [#allocation15]
      %60 = sst [smem:[#allocation13]] [#allocation14]
    $region16: #{bpr_forward.1} parent=5 // pred_fallthru
      _
    %62 = shalt.err (0)
    %s64 = sshll.u32 %s54, 4
    %s65 = int_to_ptr.hbm [resolvable:$true] %s64
    %s66 = sshll.u32 %s55, 4
    %s67 = int_to_ptr.vmem [resolvable:$true] %s66
    %69 = dma.hbm_to_vmem [thread:$0]  %s65, 16, %s67, %s56
    %s70 = scalar_lea.hbm %s4, %s38
    %s71 = scalar_lea.vmem [#allocation4], %s30
    %s72 = scalar_lea.sflag [#allocation5], 2
    // Predicated region
    $region17: #{bpr_forward.1} parent=5 // pred_check
      _
    $region18: #{bpr_forward.1} parent=5 // pred_check_branch
      %74 = sbr.rel target = $region20
    $region19: #{bpr_forward.1} parent=5 // pred_region
      %75 = sst [smem:[#allocation12]] [#allocation17]
      %76 = sst [smem:[#allocation13]] [#allocation16]
    $region20: #{bpr_forward.1} parent=5 // pred_fallthru
      _
    %78 = shalt.err (0)
    %s80 = sshll.u32 %s70, 4
    %s81 = int_to_ptr.hbm [resolvable:$true] %s80
    %s82 = sshll.u32 %s71, 4
    %s83 = int_to_ptr.vmem [resolvable:$true] %s82
    %85 = dma.hbm_to_vmem [thread:$0]  %s81, 16, %s83, %s72
  $region6: #{bpr_forward.1} parent=0 // loop_footer
    %s34 = sadd.s32 1, %s30
  $region7: #{bpr_forward.1} parent=0 // loop_footer_branch
    %29 = sbr.rel target = $region3
  $region8: #{bpr_forward.1} parent=0 // loop_exit
    _
  loop: start=0, step=1, limit=8
  $region21: #{bpr_forward.1} parent=0 // loop_pre_header
    _
  $region22: #{bpr_forward.1} parent=0 // loop_header
    %s87 = sphi 0, %s91
    %p88 = scmp.ge.s32.totalorder %s87, 8
  $region23: #{bpr_forward.1} parent=0 // loop_header_branch
    %90 = sbr.rel (%p88) target = $region27
  $region24: #{bpr_forward.1} parent=0 // loop_body
    %s92 = smul.u32 1, 1
    %s93 = sshll.u32 %s92, 4
    %94 = dma.done [#allocation5], %s93
    %s95 = scalar_lea.sflag [#allocation5], 1
    %s96 = sshll.u32 %s92, 4
    %97 = dma.done %s95, %s96
    %s98 = scalar_lea.sflag [#allocation5], 2
    %s99 = sshll.u32 %s92, 4
    %100 = dma.done %s98, %s99
  $region25: #{bpr_forward.1} parent=0 // loop_footer
    %s91 = sadd.s32 1, %s87
  $region26: #{bpr_forward.1} parent=0 // loop_footer_branch
    %86 = sbr.rel target = $region22
  $region27: #{bpr_forward.1} parent=0 // loop_exit
    _
  %v101 = vld [vmem:[#allocation2] sm:$0xff]
  %v102 = vld [vmem:[#allocation3] sm:$0xff]
  %v103 = vld [vmem:[#allocation4] sm:$0xff]
  %v104 = vmul.f32 %v101, %v102
  %105 = vadd.xlane.f32.xlu0 %v104
  %v106 = vpop.xlane.xlu0 %105
  %v107 = vmul.f32 %v101, %v103
  %108 = vadd.xlane.f32.xlu0 %v107
  %v109 = vpop.xlane.xlu0 %108
  %vm110 = vcmask 7168
  %v111 = vsel %vm110, %v106, %v109
  %vm112 = vcmask 15360
  %113 = vst.msk [vmem:[%s5] sm:$0xff] %vm112, %v111
  // Predicated region
  $region28: #{bpr_forward.1} parent=0 // pred_check
    _
  $region29: #{bpr_forward.1} parent=0 // pred_check_branch
    %115 = sbr.rel (0) target = $region31
  $region30: #{bpr_forward.1} parent=0 // pred_region
    _
  $region31: #{bpr_forward.1} parent=0 // pred_fallthru
    _
  // Predicated region
  $region32: #{bpr_forward.1} parent=0 // pred_check
    _
  $region33: #{bpr_forward.1} parent=0 // pred_check_branch
    %117 = sbr.rel (0) target = $region35
  $region34: #{bpr_forward.1} parent=0 // pred_region
    _
  $region35: #{bpr_forward.1} parent=0 // pred_fallthru
    _
  %118 = vsyncmov [#allocation5]
  %s119 = vpop.sfrf %118
  %p120 = scmp.eq.s32.totalorder %s119, 0
  %p121 = pneg %p120
  %123 = shalt.err (%p121)
  %s124 = scalar_lea.sflag [#allocation5], 1
  %125 = vsyncmov %s124
  %s126 = vpop.sfrf %125
  %p127 = scmp.eq.s32.totalorder %s126, 0
  %p128 = pneg %p127
  %130 = shalt.err (%p128)
  %s131 = scalar_lea.sflag [#allocation5], 2
  %132 = vsyncmov %s131
  %s133 = vpop.sfrf %132
  %p134 = scmp.eq.s32.totalorder %s133, 0
  %p135 = pneg %p134
  %137 = shalt.err (%p135)

</llo_original>
